<compile_context>
chip_gen: v6e
topology: v6e:2x2x1
jax: 0.10.0
libtpu: 0.0.40
codegen_flags: <defaults>
</compile_context>

<pallas_src>
import jax
import jax.numpy as jnp
from jax.experimental import pallas as pl
from jax.experimental.pallas import tpu as pltpu


def fused_lstm_dense_kernel(x_ref, w0_ref, wr_ref, b_ref, wd_ref, bd_ref,
                            out_ref, h_scr, c_scr, acc_scr):
    """One grid step = one timestep of the multi-layer LSTM + dense accumulation.

    Gate packing along the 4H axis follows PyTorch's nn.LSTM order [i, f, g, o].
    h_scr / c_scr: (L, 1, H) persistent VMEM state.  acc_scr: (1, Out) running
    dense accumulator (sum_t h_t @ Wd[t]); bias + sigmoid applied at t == T-1.
    """
    t = pl.program_id(0)

    @pl.when(t == 0)
    def _init():
        # nn.LSTM default: zero initial hidden/cell state.
        h_scr[...] = jnp.zeros_like(h_scr)
        c_scr[...] = jnp.zeros_like(c_scr)
        acc_scr[...] = jnp.zeros_like(acc_scr)

    num_layers, _, hidden = h_scr.shape

    layer_in = x_ref[0]                      # (1, In) for layer 0
    for l in range(num_layers):              # static unroll over layers
        h_prev = h_scr[l]                    # (1, H)
        c_prev = c_scr[l]                    # (1, H)
        w = w0_ref[...] if l == 0 else wr_ref[l - 1]   # (In+H,4H) / (2H,4H)

        # Single MXU dot per layer: [x|h] @ [W_ih^T ; W_hh^T] + (b_ih + b_hh)
        xh = jnp.concatenate([layer_in, h_prev], axis=-1)
        gates = (jnp.dot(xh, w, preferred_element_type=jnp.float32)
                 + b_ref[l])                 # (1, 4H)

        i_g = jax.nn.sigmoid(gates[:, 0 * hidden:1 * hidden])
        f_g = jax.nn.sigmoid(gates[:, 1 * hidden:2 * hidden])
        g_g = jnp.tanh(gates[:, 2 * hidden:3 * hidden])
        o_g = jax.nn.sigmoid(gates[:, 3 * hidden:4 * hidden])

        c_new = f_g * c_prev + i_g * g_g
        h_new = o_g * jnp.tanh(c_new)

        c_scr[l] = c_new
        h_scr[l] = h_new
        layer_in = h_new                     # feeds the next layer this step

    # Fused dense: reshape(-1, H*T) @ W_dense.T  ==  sum_t h_t @ W_dense[:, tH:(t+1)H].T
    acc_scr[...] += jnp.dot(layer_in, wd_ref[0],
                            preferred_element_type=jnp.float32)

    @pl.when(t == pl.num_programs(0) - 1)
    def _finalize():
        out_ref[...] = jax.nn.sigmoid(acc_scr[...] + bd_ref[...]).astype(out_ref.dtype)


@jax.jit
def modified_lstm_forward(x, w0, wr, b_all, wd, bd):
    """Pallas equivalent of ModifiedLSTM.forward(X) for X of shape (T, 1, In)."""
    seq_len, _, in_size = x.shape
    num_layers = b_all.shape[0]
    hidden = b_all.shape[2] // 4
    out_size = wd.shape[2]
    lr = wr.shape[0]

    return pl.pallas_call(
        fused_lstm_dense_kernel,
        out_shape=jax.ShapeDtypeStruct((1, out_size), jnp.float32),
        grid_spec=pltpu.PrefetchScalarGridSpec(
            num_scalar_prefetch=0,
            grid=(seq_len,),
            in_specs=[
                # per-timestep input slice
                pl.BlockSpec((1, 1, in_size), lambda t: (t, 0, 0)),
                # layer-0 packed weight, resident (constant block index)
                pl.BlockSpec((in_size + hidden, 4 * hidden), lambda t: (0, 0)),
                # layers 1..L-1 packed weights, resident
                pl.BlockSpec((lr, 2 * hidden, 4 * hidden), lambda t: (0, 0, 0)),
                # combined biases, resident
                pl.BlockSpec((num_layers, 1, 4 * hidden), lambda t: (0, 0, 0)),
                # dense weight slice for this timestep
                pl.BlockSpec((1, hidden, out_size), lambda t: (t, 0, 0)),
                # dense bias, resident
                pl.BlockSpec((1, out_size), lambda t: (0, 0)),
            ],
            out_specs=pl.BlockSpec((1, out_size), lambda t: (0, 0)),
            scratch_shapes=[
                pltpu.VMEM((num_layers, 1, hidden), jnp.float32),  # h state
                pltpu.VMEM((num_layers, 1, hidden), jnp.float32),  # c state
                pltpu.VMEM((1, out_size), jnp.float32),            # dense acc
            ],
        ),
        compiler_params=pltpu.CompilerParams(
            dimension_semantics=("arbitrary",)),
    )(x, w0, wr, b_all, wd, bd)


def modified_lstm_ref(x, w_ih, w_hh, b_ih, b_hh, w_dense, b_dense):
    """Pure-JAX reference mirroring the PyTorch ModifiedLSTM.forward."""
    seq_len, batch, _ = x.shape
    num_layers = len(w_ih)
    hidden = w_hh[0].shape[1]
    layer_in = x
    for l in range(num_layers):
        b = b_ih[l] + b_hh[l]
        h = jnp.zeros((batch, hidden), jnp.float32)
        c = jnp.zeros((batch, hidden), jnp.float32)
        outs = []
        for t in range(seq_len):
            g = layer_in[t] @ w_ih[l].T + h @ w_hh[l].T + b
            i = jax.nn.sigmoid(g[:, 0 * hidden:1 * hidden])
            f = jax.nn.sigmoid(g[:, 1 * hidden:2 * hidden])
            gg = jnp.tanh(g[:, 2 * hidden:3 * hidden])
            o = jax.nn.sigmoid(g[:, 3 * hidden:4 * hidden])
            c = f * c + i * gg
            h = o * jnp.tanh(c)
            outs.append(h)
        layer_in = jnp.stack(outs)                       # (T, B, H)
    flat = layer_in.reshape(-1, hidden * seq_len)        # module's reshape (batch=1)
    return jax.nn.sigmoid(flat @ w_dense.T + b_dense)


if __name__ == "__main__":
    # Shapes consistent with the module's kwargs.
    input_size = 16       # kwargs['input_size']
    hidden_size = 32      # kwargs['hidden_size']  -> 4*H = 128 lane-dense gates
    hidden_number = 2     # kwargs['hidden_number'] (nn.LSTM num_layers)
    input_number = 8      # kwargs['input_number']  (= seq_len for the reshape)
    output_size = 8       # kwargs['output_size']
    batch = 1             # the reshape(-1, H*input_number) implies batch 1

    key = jax.random.PRNGKey(0)
    keys = list(jax.random.split(key, 4 * hidden_number + 3))
    k_iter = iter(keys)

    # PyTorch-layout LSTM parameters (stand-in for init_weights(f)),
    # gate order [i, f, g, o] as in nn.LSTM.
    w_ih, w_hh, b_ih, b_hh = [], [], [], []
    for l in range(hidden_number):
        in_l = input_size if l == 0 else hidden_size
        w_ih.append(0.1 * jax.random.normal(next(k_iter), (4 * hidden_size, in_l), jnp.float32))
        w_hh.append(0.1 * jax.random.normal(next(k_iter), (4 * hidden_size, hidden_size), jnp.float32))
        b_ih.append(0.1 * jax.random.normal(next(k_iter), (4 * hidden_size,), jnp.float32))
        b_hh.append(0.1 * jax.random.normal(next(k_iter), (4 * hidden_size,), jnp.float32))
    w_dense = 0.1 * jax.random.normal(next(k_iter),
                                      (output_size, hidden_size * input_number), jnp.float32)
    b_dense = 0.1 * jax.random.normal(next(k_iter), (output_size,), jnp.float32)
    x = jax.random.normal(next(k_iter), (input_number, batch, input_size), jnp.float32)

    # ---- pack parameters for the fused kernel ----
    # layer 0: [W_ih^T ; W_hh^T]  -> (In+H, 4H)
    w0 = jnp.concatenate([w_ih[0].T, w_hh[0].T], axis=0)
    # layers 1..L-1: each (2H, 4H), stacked
    if hidden_number > 1:
        wr = jnp.stack([jnp.concatenate([w_ih[l].T, w_hh[l].T], axis=0)
                        for l in range(1, hidden_number)])
    else:
        wr = jnp.zeros((1, 2 * hidden_size, 4 * hidden_size), jnp.float32)  # unused dummy
    # combined biases per layer
    b_all = jnp.stack([(b_ih[l] + b_hh[l])[None, :] for l in range(hidden_number)])
    # dense weight split per timestep: wd[t] = W_dense[:, t*H:(t+1)*H].T  -> (T, H, Out)
    wd = w_dense.reshape(output_size, input_number, hidden_size).transpose(1, 2, 0)
    bd = b_dense[None, :]

    out = modified_lstm_forward(x, w0, wr, b_all, wd, bd)
    out = jax.block_until_ready(out)

    ref = modified_lstm_ref(x, w_ih, w_hh, b_ih, b_hh, w_dense, b_dense)

    assert out.shape == (1, output_size), out.shape
    max_err = float(jnp.max(jnp.abs(out - ref)))
    assert jnp.allclose(out, ref, atol=1e-4, rtol=1e-4), f"max |err| = {max_err}"

    # TODO(synk): torch.save / ModifiedLSTM.load and init_weights(f) are host-side
    # model-management utilities with no kernel equivalent.
    print("KERNEL_OK")
</pallas_src>

<mosaic_0001>
module attributes {stable_mosaic.version = 11 : i64} {
  func.func @fused_lstm_dense_kernel(%arg0: i32, %arg1: memref<1x1x16xf32, #tpu.memory_space<vmem>>, %arg2: memref<48x128xf32, #tpu.memory_space<vmem>>, %arg3: memref<1x64x128xf32, #tpu.memory_space<vmem>>, %arg4: memref<2x1x128xf32, #tpu.memory_space<vmem>>, %arg5: memref<1x32x8xf32, #tpu.memory_space<vmem>>, %arg6: memref<1x8xf32, #tpu.memory_space<vmem>>, %arg7: memref<1x8xf32, #tpu.memory_space<vmem>>, %arg8: memref<2x1x32xf32, #tpu.memory_space<vmem>>, %arg9: memref<2x1x32xf32, #tpu.memory_space<vmem>>, %arg10: memref<1x8xf32, #tpu.memory_space<vmem>>) attributes {dimension_semantics = [#tpu.dimension_semantics<arbitrary>], iteration_bounds = array<i64: 8>, scalar_prefetch = 0 : i64, scratch_operands = 3 : i64, tpu.core_type = #tpu.core_type<tc>, window_params = [{transform_indices = @transform_0, window_bounds = array<i64: 1, 1, 16>}, {pipeline_mode = #tpu.pipeline_mode<synchronous>, transform_indices = @transform_1, window_bounds = array<i64: 48, 128>}, {pipeline_mode = #tpu.pipeline_mode<synchronous>, transform_indices = @transform_2, window_bounds = array<i64: 1, 64, 128>}, {pipeline_mode = #tpu.pipeline_mode<synchronous>, transform_indices = @transform_3, window_bounds = array<i64: 2, 1, 128>}, {transform_indices = @transform_4, window_bounds = array<i64: 1, 32, 8>}, {pipeline_mode = #tpu.pipeline_mode<synchronous>, transform_indices = @transform_5, window_bounds = array<i64: 1, 8>}, {pipeline_mode = #tpu.pipeline_mode<synchronous>, transform_indices = @transform_6, window_bounds = array<i64: 1, 8>}]} {
    %c0_i32 = arith.constant 0 : i32
    %0 = arith.cmpi eq, %arg0, %c0_i32 : i32
    %1 = arith.extui %0 : i1 to i32
    %c0_i32_0 = arith.constant 0 : i32
    %2 = arith.cmpi ne, %1, %c0_i32_0 : i32
    scf.if %2 {
      %cst_53 = arith.constant 0.000000e+00 : f32
      %97 = vector.broadcast %cst_53 : f32 to vector<2x1x32xf32>
      %c0_54 = arith.constant 0 : index
      %c0_55 = arith.constant 0 : index
      %c0_56 = arith.constant 0 : index
      %98 = vector.load %arg8[%c0_54, %c0_55, %c0_56] : memref<2x1x32xf32, #tpu.memory_space<vmem>>, vector<2x1x32xf32>
      tpu.vector_store %arg8[%c0_54, %c0_55, %c0_56], %97 {strides = array<i32>} : memref<2x1x32xf32, #tpu.memory_space<vmem>>, vector<2x1x32xf32>,
      %cst_57 = arith.constant 0.000000e+00 : f32
      %99 = vector.broadcast %cst_57 : f32 to vector<2x1x32xf32>
      %c0_58 = arith.constant 0 : index
      %c0_59 = arith.constant 0 : index
      %c0_60 = arith.constant 0 : index
      %100 = vector.load %arg9[%c0_58, %c0_59, %c0_60] : memref<2x1x32xf32, #tpu.memory_space<vmem>>, vector<2x1x32xf32>
      tpu.vector_store %arg9[%c0_58, %c0_59, %c0_60], %99 {strides = array<i32>} : memref<2x1x32xf32, #tpu.memory_space<vmem>>, vector<2x1x32xf32>,
      %cst_61 = arith.constant 0.000000e+00 : f32
      %101 = vector.broadcast %cst_61 : f32 to vector<1x8xf32>
      %c0_62 = arith.constant 0 : index
      %c0_63 = arith.constant 0 : index
      %102 = vector.load %arg10[%c0_62, %c0_63] : memref<1x8xf32, #tpu.memory_space<vmem>>, vector<1x8xf32>
      tpu.vector_store %arg10[%c0_62, %c0_63], %101 {strides = array<i32>} : memref<1x8xf32, #tpu.memory_space<vmem>>, vector<1x8xf32>,
    } else {
    }
    %c0 = arith.constant 0 : index
    %c0_1 = arith.constant 0 : index
    %c0_2 = arith.constant 0 : index
    %3 = vector.load %arg1[%c0, %c0_1, %c0_2] : memref<1x1x16xf32, #tpu.memory_space<vmem>>, vector<1x1x16xf32>
    %4 = vector.shape_cast %3 : vector<1x1x16xf32> to vector<1x16xf32>
    %c0_3 = arith.constant 0 : index
    %c0_4 = arith.constant 0 : index
    %c0_5 = arith.constant 0 : index
    %5 = vector.load %arg8[%c0_3, %c0_4, %c0_5] : memref<2x1x32xf32, #tpu.memory_space<vmem>>, vector<1x1x32xf32>
    %6 = vector.shape_cast %5 : vector<1x1x32xf32> to vector<1x32xf32>
    %c0_6 = arith.constant 0 : index
    %c0_7 = arith.constant 0 : index
    %c0_8 = arith.constant 0 : index
    %7 = vector.load %arg9[%c0_6, %c0_7, %c0_8] : memref<2x1x32xf32, #tpu.memory_space<vmem>>, vector<1x1x32xf32>
    %8 = vector.shape_cast %7 : vector<1x1x32xf32> to vector<1x32xf32>
    %c0_9 = arith.constant 0 : index
    %c0_10 = arith.constant 0 : index
    %9 = vector.load %arg2[%c0_9, %c0_10] : memref<48x128xf32, #tpu.memory_space<vmem>>, vector<48x128xf32>
    %10 = tpu.concatenate %4, %6 in 1 : vector<1x16xf32>, vector<1x32xf32> -> vector<1x48xf32>
    %cst = arith.constant dense<0.000000e+00> : vector<1x128xf32>
    %11 = tpu.matmul %10, %9, %cst {dimension_numbers = #tpu.dot_dimension_numbers<[1], [0], [0], [1], [0, 0, 1, 1], [], []>} : vector<1x48xf32>, vector<48x128xf32>, vector<1x128xf32> -> vector<1x128xf32>
    %c0_11 = arith.constant 0 : index
    %c0_12 = arith.constant 0 : index
    %c0_13 = arith.constant 0 : index
    %12 = vector.load %arg4[%c0_11, %c0_12, %c0_13] : memref<2x1x128xf32, #tpu.memory_space<vmem>>, vector<1x1x128xf32>
    %13 = vector.shape_cast %12 : vector<1x1x128xf32> to vector<1x128xf32>
    %14 = arith.addf %11, %13 : vector<1x128xf32>
    %15 = vector.extract_strided_slice %14 {offsets = [0, 0], sizes = [1, 32], strides = [1, 1]} : vector<1x128xf32> to vector<1x32xf32>
    %16 = arith.negf %15 : vector<1x32xf32>
    %17 = math.exp %16 : vector<1x32xf32>
    %cst_14 = arith.constant 1.000000e+00 : f32
    %18 = vector.broadcast %cst_14 : f32 to vector<1x32xf32>
    %19 = arith.addf %18, %17 : vector<1x32xf32>
    %20 = arith.divf %18, %19 : vector<1x32xf32>
    %21 = vector.extract_strided_slice %14 {offsets = [0, 32], sizes = [1, 32], strides = [1, 1]} : vector<1x128xf32> to vector<1x32xf32>
    %22 = arith.negf %21 : vector<1x32xf32>
    %23 = math.exp %22 : vector<1x32xf32>
    %cst_15 = arith.constant 1.000000e+00 : f32
    %24 = vector.broadcast %cst_15 : f32 to vector<1x32xf32>
    %25 = arith.addf %24, %23 : vector<1x32xf32>
    %26 = arith.divf %24, %25 : vector<1x32xf32>
    %27 = vector.extract_strided_slice %14 {offsets = [0, 64], sizes = [1, 32], strides = [1, 1]} : vector<1x128xf32> to vector<1x32xf32>
    %28 = math.tanh %27 : vector<1x32xf32>
    %29 = vector.extract_strided_slice %14 {offsets = [0, 96], sizes = [1, 32], strides = [1, 1]} : vector<1x128xf32> to vector<1x32xf32>
    %30 = arith.negf %29 : vector<1x32xf32>
    %31 = math.exp %30 : vector<1x32xf32>
    %cst_16 = arith.constant 1.000000e+00 : f32
    %32 = vector.broadcast %cst_16 : f32 to vector<1x32xf32>
    %33 = arith.addf %32, %31 : vector<1x32xf32>
    %34 = arith.divf %32, %33 : vector<1x32xf32>
    %35 = arith.mulf %26, %8 : vector<1x32xf32>
    %36 = arith.mulf %20, %28 : vector<1x32xf32>
    %37 = arith.addf %35, %36 : vector<1x32xf32>
    %38 = math.tanh %37 : vector<1x32xf32>
    %39 = arith.mulf %34, %38 : vector<1x32xf32>
    %c0_17 = arith.constant 0 : index
    %c0_18 = arith.constant 0 : index
    %c0_19 = arith.constant 0 : index
    %40 = vector.load %arg9[%c0_17, %c0_18, %c0_19] : memref<2x1x32xf32, #tpu.memory_space<vmem>>, vector<1x1x32xf32>
    %41 = vector.shape_cast %40 : vector<1x1x32xf32> to vector<1x32xf32>
    %42 = vector.shape_cast %37 : vector<1x32xf32> to vector<1x1x32xf32>
    tpu.vector_store %arg9[%c0_17, %c0_18, %c0_19], %42 {strides = array<i32>} : memref<2x1x32xf32, #tpu.memory_space<vmem>>, vector<1x1x32xf32>,
    %c0_20 = arith.constant 0 : index
    %c0_21 = arith.constant 0 : index
    %c0_22 = arith.constant 0 : index
    %43 = vector.load %arg8[%c0_20, %c0_21, %c0_22] : memref<2x1x32xf32, #tpu.memory_space<vmem>>, vector<1x1x32xf32>
    %44 = vector.shape_cast %43 : vector<1x1x32xf32> to vector<1x32xf32>
    %45 = vector.shape_cast %39 : vector<1x32xf32> to vector<1x1x32xf32>
    tpu.vector_store %arg8[%c0_20, %c0_21, %c0_22], %45 {strides = array<i32>} : memref<2x1x32xf32, #tpu.memory_space<vmem>>, vector<1x1x32xf32>,
    %c1 = arith.constant 1 : index
    %c0_23 = arith.constant 0 : index
    %c0_24 = arith.constant 0 : index
    %46 = vector.load %arg8[%c1, %c0_23, %c0_24] : memref<2x1x32xf32, #tpu.memory_space<vmem>>, vector<1x1x32xf32>
    %47 = vector.shape_cast %46 : vector<1x1x32xf32> to vector<1x32xf32>
    %c1_25 = arith.constant 1 : index
    %c0_26 = arith.constant 0 : index
    %c0_27 = arith.constant 0 : index
    %48 = vector.load %arg9[%c1_25, %c0_26, %c0_27] : memref<2x1x32xf32, #tpu.memory_space<vmem>>, vector<1x1x32xf32>
    %49 = vector.shape_cast %48 : vector<1x1x32xf32> to vector<1x32xf32>
    %c0_28 = arith.constant 0 : index
    %c0_29 = arith.constant 0 : index
    %c0_30 = arith.constant 0 : index
    %50 = vector.load %arg3[%c0_28, %c0_29, %c0_30] : memref<1x64x128xf32, #tpu.memory_space<vmem>>, vector<1x64x128xf32>
    %51 = vector.shape_cast %50 : vector<1x64x128xf32> to vector<64x128xf32>
    %52 = tpu.concatenate %39, %47 in 1 : vector<1x32xf32>, vector<1x32xf32> -> vector<1x64xf32>
    %cst_31 = arith.constant dense<0.000000e+00> : vector<1x128xf32>
    %53 = tpu.matmul %52, %51, %cst_31 {dimension_numbers = #tpu.dot_dimension_numbers<[1], [0], [0], [1], [0, 0, 1, 1], [], []>} : vector<1x64xf32>, vector<64x128xf32>, vector<1x128xf32> -> vector<1x128xf32>
    %c1_32 = arith.constant 1 : index
    %c0_33 = arith.constant 0 : index
    %c0_34 = arith.constant 0 : index
    %54 = vector.load %arg4[%c1_32, %c0_33, %c0_34] : memref<2x1x128xf32, #tpu.memory_space<vmem>>, vector<1x1x128xf32>
    %55 = vector.shape_cast %54 : vector<1x1x128xf32> to vector<1x128xf32>
    %56 = arith.addf %53, %55 : vector<1x128xf32>
    %57 = vector.extract_strided_slice %56 {offsets = [0, 0], sizes = [1, 32], strides = [1, 1]} : vector<1x128xf32> to vector<1x32xf32>
    %58 = arith.negf %57 : vector<1x32xf32>
    %59 = math.exp %58 : vector<1x32xf32>
    %cst_35 = arith.constant 1.000000e+00 : f32
    %60 = vector.broadcast %cst_35 : f32 to vector<1x32xf32>
    %61 = arith.addf %60, %59 : vector<1x32xf32>
    %62 = arith.divf %60, %61 : vector<1x32xf32>
    %63 = vector.extract_strided_slice %56 {offsets = [0, 32], sizes = [1, 32], strides = [1, 1]} : vector<1x128xf32> to vector<1x32xf32>
    %64 = arith.negf %63 : vector<1x32xf32>
    %65 = math.exp %64 : vector<1x32xf32>
    %cst_36 = arith.constant 1.000000e+00 : f32
    %66 = vector.broadcast %cst_36 : f32 to vector<1x32xf32>
    %67 = arith.addf %66, %65 : vector<1x32xf32>
    %68 = arith.divf %66, %67 : vector<1x32xf32>
    %69 = vector.extract_strided_slice %56 {offsets = [0, 64], sizes = [1, 32], strides = [1, 1]} : vector<1x128xf32> to vector<1x32xf32>
    %70 = math.tanh %69 : vector<1x32xf32>
    %71 = vector.extract_strided_slice %56 {offsets = [0, 96], sizes = [1, 32], strides = [1, 1]} : vector<1x128xf32> to vector<1x32xf32>
    %72 = arith.negf %71 : vector<1x32xf32>
    %73 = math.exp %72 : vector<1x32xf32>
    %cst_37 = arith.constant 1.000000e+00 : f32
    %74 = vector.broadcast %cst_37 : f32 to vector<1x32xf32>
    %75 = arith.addf %74, %73 : vector<1x32xf32>
    %76 = arith.divf %74, %75 : vector<1x32xf32>
    %77 = arith.mulf %68, %49 : vector<1x32xf32>
    %78 = arith.mulf %62, %70 : vector<1x32xf32>
    %79 = arith.addf %77, %78 : vector<1x32xf32>
    %80 = math.tanh %79 : vector<1x32xf32>
    %81 = arith.mulf %76, %80 : vector<1x32xf32>
    %c1_38 = arith.constant 1 : index
    %c0_39 = arith.constant 0 : index
    %c0_40 = arith.constant 0 : index
    %82 = vector.load %arg9[%c1_38, %c0_39, %c0_40] : memref<2x1x32xf32, #tpu.memory_space<vmem>>, vector<1x1x32xf32>
    %83 = vector.shape_cast %82 : vector<1x1x32xf32> to vector<1x32xf32>
    %84 = vector.shape_cast %79 : vector<1x32xf32> to vector<1x1x32xf32>
    tpu.vector_store %arg9[%c1_38, %c0_39, %c0_40], %84 {strides = array<i32>} : memref<2x1x32xf32, #tpu.memory_space<vmem>>, vector<1x1x32xf32>,
    %c1_41 = arith.constant 1 : index
    %c0_42 = arith.constant 0 : index
    %c0_43 = arith.constant 0 : index
    %85 = vector.load %arg8[%c1_41, %c0_42, %c0_43] : memref<2x1x32xf32, #tpu.memory_space<vmem>>, vector<1x1x32xf32>
    %86 = vector.shape_cast %85 : vector<1x1x32xf32> to vector<1x32xf32>
    %87 = vector.shape_cast %81 : vector<1x32xf32> to vector<1x1x32xf32>
    tpu.vector_store %arg8[%c1_41, %c0_42, %c0_43], %87 {strides = array<i32>} : memref<2x1x32xf32, #tpu.memory_space<vmem>>, vector<1x1x32xf32>,
    %c0_44 = arith.constant 0 : index
    %c0_45 = arith.constant 0 : index
    %88 = vector.load %arg10[%c0_44, %c0_45] : memref<1x8xf32, #tpu.memory_space<vmem>>, vector<1x8xf32>
    %c0_46 = arith.constant 0 : index
    %c0_47 = arith.constant 0 : index
    %c0_48 = arith.constant 0 : index
    %89 = vector.load %arg5[%c0_46, %c0_47, %c0_48] : memref<1x32x8xf32, #tpu.memory_space<vmem>>, vector<1x32x8xf32>
    %90 = vector.shape_cast %89 : vector<1x32x8xf32> to vector<32x8xf32>
    %cst_49 = arith.constant dense<0.000000e+00> : vector<1x8xf32>
    %91 = tpu.matmul %81, %90, %cst_49 {dimension_numbers = #tpu.dot_dimension_numbers<[1], [0], [0], [1], [0, 0, 1, 1], [], []>} : vector<1x32xf32>, vector<32x8xf32>, vector<1x8xf32> -> vector<1x8xf32>
    %92 = arith.addf %88, %91 : vector<1x8xf32>
    %c0_50 = arith.constant 0 : index
    %c0_51 = arith.constant 0 : index
    %93 = vector.load %arg10[%c0_50, %c0_51] : memref<1x8xf32, #tpu.memory_space<vmem>>, vector<1x8xf32>
    tpu.vector_store %arg10[%c0_50, %c0_51], %92 {strides = array<i32>} : memref<1x8xf32, #tpu.memory_space<vmem>>, vector<1x8xf32>,
    %c7_i32 = arith.constant 7 : i32
    %94 = arith.cmpi eq, %arg0, %c7_i32 : i32
    %95 = arith.extui %94 : i1 to i32
    %c0_i32_52 = arith.constant 0 : i32
    %96 = arith.cmpi ne, %95, %c0_i32_52 : i32
    scf.if %96 {
      %c0_53 = arith.constant 0 : index
      %c0_54 = arith.constant 0 : index
      %97 = vector.load %arg10[%c0_53, %c0_54] : memref<1x8xf32, #tpu.memory_space<vmem>>, vector<1x8xf32>
      %c0_55 = arith.constant 0 : index
      %c0_56 = arith.constant 0 : index
      %98 = vector.load %arg6[%c0_55, %c0_56] : memref<1x8xf32, #tpu.memory_space<vmem>>, vector<1x8xf32>
      %99 = arith.addf %97, %98 : vector<1x8xf32>
      %100 = arith.negf %99 : vector<1x8xf32>
      %101 = math.exp %100 : vector<1x8xf32>
      %cst_57 = arith.constant 1.000000e+00 : f32
      %102 = vector.broadcast %cst_57 : f32 to vector<1x8xf32>
      %103 = arith.addf %102, %101 : vector<1x8xf32>
      %104 = arith.divf %102, %103 : vector<1x8xf32>
      %c0_58 = arith.constant 0 : index
      %c0_59 = arith.constant 0 : index
      %105 = vector.load %arg7[%c0_58, %c0_59] : memref<1x8xf32, #tpu.memory_space<vmem>>, vector<1x8xf32>
      tpu.vector_store %arg7[%c0_58, %c0_59], %104 {strides = array<i32>} : memref<1x8xf32, #tpu.memory_space<vmem>>, vector<1x8xf32>,
    } else {
    }
    return
  }
  func.func @transform_0(%arg0: i32) -> (i32, i32, i32) {
    %c0_i32 = arith.constant 0 : i32
    %c0_i32_0 = arith.constant 0 : i32
    %c0_i32_1 = arith.constant 0 : i32
    return %arg0, %c0_i32, %c0_i32_0 : i32, i32, i32
  }
  func.func @transform_1(%arg0: i32) -> (i32, i32) {
    %c0_i32 = arith.constant 0 : i32
    %c0_i32_0 = arith.constant 0 : i32
    %c0_i32_1 = arith.constant 0 : i32
    return %c0_i32, %c0_i32_0 : i32, i32
  }
  func.func @transform_2(%arg0: i32) -> (i32, i32, i32) {
    %c0_i32 = arith.constant 0 : i32
    %c0_i32_0 = arith.constant 0 : i32
    %c0_i32_1 = arith.constant 0 : i32
    %c0_i32_2 = arith.constant 0 : i32
    return %c0_i32, %c0_i32_0, %c0_i32_1 : i32, i32, i32
  }
  func.func @transform_3(%arg0: i32) -> (i32, i32, i32) {
    %c0_i32 = arith.constant 0 : i32
    %c0_i32_0 = arith.constant 0 : i32
    %c0_i32_1 = arith.constant 0 : i32
    %c0_i32_2 = arith.constant 0 : i32
    return %c0_i32, %c0_i32_0, %c0_i32_1 : i32, i32, i32
  }
  func.func @transform_4(%arg0: i32) -> (i32, i32, i32) {
    %c0_i32 = arith.constant 0 : i32
    %c0_i32_0 = arith.constant 0 : i32
    %c0_i32_1 = arith.constant 0 : i32
    return %arg0, %c0_i32, %c0_i32_0 : i32, i32, i32
  }
  func.func @transform_5(%arg0: i32) -> (i32, i32) {
    %c0_i32 = arith.constant 0 : i32
    %c0_i32_0 = arith.constant 0 : i32
    %c0_i32_1 = arith.constant 0 : i32
    return %c0_i32, %c0_i32_0 : i32, i32
  }
  func.func @transform_6(%arg0: i32) -> (i32, i32) {
    %c0_i32 = arith.constant 0 : i32
    %c0_i32_0 = arith.constant 0 : i32
    %c0_i32_1 = arith.constant 0 : i32
    return %c0_i32, %c0_i32_0 : i32, i32
  }
}

</mosaic_0001>

<llo_original>
// kernel: modified_lstm_forward.1
$region0: #{modified_lstm_forward.1}
  #allocation0 [shape = 'u32[]', space=smem, size = 0x4, offset = 0x4, fixed_abs, tag = 'smem constant byte address 0x4 - core index']
  #allocation1 [shape = 'u32[144,128]{1,0:T(1,128)}', space=vmem, size = 0x12000, scoped, tag = 'internal scratch']
  #allocation2 [shape = 'f32[2,1,32]{2,1,0:T(1,128)}', space=vmem, size = 0x400, scoped, tag = 'scratch operand']
  #allocation3 [shape = 'f32[2,1,32]{2,1,0:T(1,128)}', space=vmem, size = 0x400, scoped, tag = 'scratch operand']
  #allocation4 [shape = 'f32[1,8]{1,0:T(1,128)}', space=vmem, size = 0x200, scoped, tag = 'scratch operand']
  %s0 = inlined_call_operand.vmem [shape: f32[8,1,16], index: 0, kind: input, shape index: {}]
  %s1 = inlined_call_operand.vmem [shape: f32[48,128], index: 1, kind: input, shape index: {}]
  %s2 = inlined_call_operand.vmem [shape: f32[1,64,128], index: 2, kind: input, shape index: {}]
  %s3 = inlined_call_operand.vmem [shape: f32[2,1,128], index: 3, kind: input, shape index: {}]
  %s4 = inlined_call_operand.vmem [shape: f32[8,32,8], index: 4, kind: input, shape index: {}]
  %s5 = inlined_call_operand.vmem [shape: f32[1,8], index: 5, kind: input, shape index: {}]
  %s6 = inlined_call_operand.hbm [shape: f32[1,8], index: 6, kind: output, shape index: {}]
  %s7 = sld [smem:[#allocation0]]
  $region65: #{modified_lstm_forward.1} parent=0
    _
  %s9 = ssub.s32 1, %s7
  %s10 = scalar_select 0, %s9, %s7
  $region1: #{modified_lstm_forward.1} parent=0
    #allocation5 [shape = 'u8[512]{0}', space=vmem, size = 0x400, scoped, tag = 'output window, operand 0, single buffered']
    #allocation6 [shape = 's32[2]{0}', space=sflag, size = 0x8, scoped, tag = 'scoped memory for modified_lstm_forward.1']
    %11 = vsyncpa [#allocation6], 0
    loop: start=0, step=1, limit=10
    $region2: #{modified_lstm_forward.1} parent=1 // loop_pre_header
      _
    $region3: #{modified_lstm_forward.1} parent=1 // loop_header
      %s13 = sphi 0, %s17
      %p14 = scmp.ge.s32.totalorder %s13, 10
      %s23 = sphi 0, %s25
      %s26 = sphi 0, %s23
      %s27 = sphi 0, %s26
      %s43 = sphi 0, %s27
      %s47 = sphi 0, %s47
      %s49 = sphi 0, %s47
      %s50 = sphi 0, %s49
      %s64 = sphi 0, %s50
      %s68 = sphi 0, %s68
      %s70 = sphi 0, %s68
      %s71 = sphi 0, %s70
      %s85 = sphi 0, %s71
      %s89 = sphi 0, %s89
      %s91 = sphi 0, %s89
      %s92 = sphi 0, %s91
      %s106 = sphi 0, %s92
      %s112 = sphi 0, %s114
      %s115 = sphi 0, %s112
      %s116 = sphi 0, %s115
      %s132 = sphi 0, %s116
      %s136 = sphi 0, %s136
      %s138 = sphi 0, %s136
      %s139 = sphi 0, %s138
      %s153 = sphi 0, %s139
      %s157 = sphi 0, %s157
      %s159 = sphi 0, %s157
      %s160 = sphi 0, %s159
      %s174 = sphi 0, %s160
    $region4: #{modified_lstm_forward.1} parent=1 // loop_header_branch
      %16 = sbr.rel (%p14) target = $region8
    $region5: #{modified_lstm_forward.1} parent=1 // loop_body
      %s18 = ssub.s32 %s13, 1
      %s19 = ssub.s32 %s13, 2
      %s20 = sadd.s32 %s13, 1
      %s21 = ssub.s32 %s13, %s20
      %p22 = scmp.eq.s32.totalorder %s21, 0
      %s24 = sadd.s32 %s23, 1
      %s25 = scalar_select %p22, %s23, %s24
      %p28 = pneg %p22
      %p29 = scmp.eq.s32.totalorder %s13, 7
      %p30 = por %p28, %p29
      %p31 = scmp.ne.s32.totalorder %s23, %s26
      %p32 = scmp.eq.s32.totalorder %s13, 0
      %p33 = por %p31, %p32
      %p34 = scmp.ne.s32.totalorder %s23, %s26
      %p35 = scmp.eq.s32.totalorder %s18, 7
      %p36 = por %p34, %p35
      %p37 = scmp.ne.s32.totalorder %s26, %s27
      %p38 = scmp.eq.s32.totalorder %s18, 0
      %p39 = por %p37, %p38
      %p40 = scmp.ne.s32.totalorder %s26, %s27
      %p41 = scmp.eq.s32.totalorder %s19, 7
      %p42 = por %p40, %p41
      %p44 = scmp.ne.s32.totalorder %s27, %s43
      %p45 = scmp.eq.s32.totalorder %s19, 0
      %p46 = por %p44, %p45
      %s48 = sadd.s32 %s47, 1
      %p51 = scmp.eq.s32.totalorder %s13, 7
      %p52 = scmp.ne.s32.totalorder %s47, %s49
      %p53 = scmp.eq.s32.totalorder %s13, 0
      %p54 = por %p52, %p53
      %p55 = scmp.ne.s32.totalorder %s47, %s49
      %p56 = scmp.eq.s32.totalorder %s18, 7
      %p57 = por %p55, %p56
      %p58 = scmp.ne.s32.totalorder %s49, %s50
      %p59 = scmp.eq.s32.totalorder %s18, 0
      %p60 = por %p58, %p59
      %p61 = scmp.ne.s32.totalorder %s49, %s50
      %p62 = scmp.eq.s32.totalorder %s19, 7
      %p63 = por %p61, %p62
      %p65 = scmp.ne.s32.totalorder %s50, %s64
      %p66 = scmp.eq.s32.totalorder %s19, 0
      %p67 = por %p65, %p66
      %s69 = sadd.s32 %s68, 1
      %p72 = scmp.eq.s32.totalorder %s13, 7
      %p73 = scmp.ne.s32.totalorder %s68, %s70
      %p74 = scmp.eq.s32.totalorder %s13, 0
      %p75 = por %p73, %p74
      %p76 = scmp.ne.s32.totalorder %s68, %s70
      %p77 = scmp.eq.s32.totalorder %s18, 7
      %p78 = por %p76, %p77
      %p79 = scmp.ne.s32.totalorder %s70, %s71
      %p80 = scmp.eq.s32.totalorder %s18, 0
      %p81 = por %p79, %p80
      %p82 = scmp.ne.s32.totalorder %s70, %s71
      %p83 = scmp.eq.s32.totalorder %s19, 7
      %p84 = por %p82, %p83
      %p86 = scmp.ne.s32.totalorder %s71, %s85
      %p87 = scmp.eq.s32.totalorder %s19, 0
      %p88 = por %p86, %p87
      %s90 = sadd.s32 %s89, 1
      %p93 = scmp.eq.s32.totalorder %s13, 7
      %p94 = scmp.ne.s32.totalorder %s89, %s91
      %p95 = scmp.eq.s32.totalorder %s13, 0
      %p96 = por %p94, %p95
      %p97 = scmp.ne.s32.totalorder %s89, %s91
      %p98 = scmp.eq.s32.totalorder %s18, 7
      %p99 = por %p97, %p98
      %p100 = scmp.ne.s32.totalorder %s91, %s92
      %p101 = scmp.eq.s32.totalorder %s18, 0
      %p102 = por %p100, %p101
      %p103 = scmp.ne.s32.totalorder %s91, %s92
      %p104 = scmp.eq.s32.totalorder %s19, 7
      %p105 = por %p103, %p104
      %p107 = scmp.ne.s32.totalorder %s92, %s106
      %p108 = scmp.eq.s32.totalorder %s19, 0
      %p109 = por %p107, %p108
      %s110 = ssub.s32 %s13, %s20
      %p111 = scmp.eq.s32.totalorder %s110, 0
      %s113 = sadd.s32 %s112, 1
      %s114 = scalar_select %p111, %s112, %s113
      %p117 = pneg %p111
      %p118 = scmp.eq.s32.totalorder %s13, 7
      %p119 = por %p117, %p118
      %p120 = scmp.ne.s32.totalorder %s112, %s115
      %p121 = scmp.eq.s32.totalorder %s13, 0
      %p122 = por %p120, %p121
      %p123 = scmp.ne.s32.totalorder %s112, %s115
      %p124 = scmp.eq.s32.totalorder %s18, 7
      %p125 = por %p123, %p124
      %p126 = scmp.ne.s32.totalorder %s115, %s116
      %p127 = scmp.eq.s32.totalorder %s18, 0
      %p128 = por %p126, %p127
      %p129 = scmp.ne.s32.totalorder %s115, %s116
      %p130 = scmp.eq.s32.totalorder %s19, 7
      %p131 = por %p129, %p130
      %p133 = scmp.ne.s32.totalorder %s116, %s132
      %p134 = scmp.eq.s32.totalorder %s19, 0
      %p135 = por %p133, %p134
      %s137 = sadd.s32 %s136, 1
      %p140 = scmp.eq.s32.totalorder %s13, 7
      %p141 = scmp.ne.s32.totalorder %s136, %s138
      %p142 = scmp.eq.s32.totalorder %s13, 0
      %p143 = por %p141, %p142
      %p144 = scmp.ne.s32.totalorder %s136, %s138
      %p145 = scmp.eq.s32.totalorder %s18, 7
      %p146 = por %p144, %p145
      %p147 = scmp.ne.s32.totalorder %s138, %s139
      %p148 = scmp.eq.s32.totalorder %s18, 0
      %p149 = por %p147, %p148
      %p150 = scmp.ne.s32.totalorder %s138, %s139
      %p151 = scmp.eq.s32.totalorder %s19, 7
      %p152 = por %p150, %p151
      %p154 = scmp.ne.s32.totalorder %s139, %s153
      %p155 = scmp.eq.s32.totalorder %s19, 0
      %p156 = por %p154, %p155
      %s158 = sadd.s32 %s157, 1
      %p161 = scmp.eq.s32.totalorder %s13, 7
      %p162 = scmp.ne.s32.totalorder %s157, %s159
      %p163 = scmp.eq.s32.totalorder %s13, 0
      %p164 = por %p162, %p163
      %p165 = scmp.ne.s32.totalorder %s157, %s159
      %p166 = scmp.eq.s32.totalorder %s18, 7
      %p167 = por %p165, %p166
      %p168 = scmp.ne.s32.totalorder %s159, %s160
      %p169 = scmp.eq.s32.totalorder %s18, 0
      %p170 = por %p168, %p169
      %p171 = scmp.ne.s32.totalorder %s159, %s160
      %p172 = scmp.eq.s32.totalorder %s19, 7
      %p173 = por %p171, %p172
      %p175 = scmp.ne.s32.totalorder %s160, %s174
      %p176 = scmp.eq.s32.totalorder %s19, 0
      %p177 = por %p175, %p176
      %p178 = scmp.le.s32.totalorder 1, %s13
      %p179 = scmp.lt.s32.totalorder %s13, 9
      %p180 = pnand %p178, %p179
      %p181 = pneg %p180
      // Predicated region
      $region9: #{modified_lstm_forward.1} parent=5 // pred_check
        _
      $region10: #{modified_lstm_forward.1} parent=5 // pred_check_branch
        %183 = sbr.rel (%p180) target = $region12
      $region11: #{modified_lstm_forward.1} parent=5 // pred_region
        %s184 = ssub.s32 %s13, 1
        // Predicated region
        $region13: #{modified_lstm_forward.1} parent=11 // pred_check
          %p185 = pneg %p60
        $region14: #{modified_lstm_forward.1} parent=11 // pred_check_branch
          %187 = sbr.rel (%p185) target = $region16
        $region15: #{modified_lstm_forward.1} parent=11 // pred_region
          _
        $region16: #{modified_lstm_forward.1} parent=11 // pred_fallthru
          _
        // Predicated region
        $region17: #{modified_lstm_forward.1} parent=11 // pred_check
          %p188 = pneg %p81
        $region18: #{modified_lstm_forward.1} parent=11 // pred_check_branch
          %190 = sbr.rel (%p188) target = $region20
        $region19: #{modified_lstm_forward.1} parent=11 // pred_region
          _
        $region20: #{modified_lstm_forward.1} parent=11 // pred_fallthru
          _
        // Predicated region
        $region21: #{modified_lstm_forward.1} parent=11 // pred_check
          %p191 = pneg %p102
        $region22: #{modified_lstm_forward.1} parent=11 // pred_check_branch
          %193 = sbr.rel (%p191) target = $region24
        $region23: #{modified_lstm_forward.1} parent=11 // pred_region
          _
        $region24: #{modified_lstm_forward.1} parent=11 // pred_fallthru
          _
        // Predicated region
        $region25: #{modified_lstm_forward.1} parent=11 // pred_check
          %p194 = pneg %p149
        $region26: #{modified_lstm_forward.1} parent=11 // pred_check_branch
          %196 = sbr.rel (%p194) target = $region28
        $region27: #{modified_lstm_forward.1} parent=11 // pred_region
          _
        $region28: #{modified_lstm_forward.1} parent=11 // pred_fallthru
          _
      $region12: #{modified_lstm_forward.1} parent=5 // pred_fallthru
        _
      %p197 = scmp.lt.s32.totalorder %s13, 8
      // Predicated region
      $region29: #{modified_lstm_forward.1} parent=5 // pred_check
        %p198 = pneg %p197
      $region30: #{modified_lstm_forward.1} parent=5 // pred_check_branch
        %200 = sbr.rel (%p198) target = $region32
      $region31: #{modified_lstm_forward.1} parent=5 // pred_region
        // Predicated region
        $region33: #{modified_lstm_forward.1} parent=31 // pred_check
          %p201 = pneg %p33
        $region34: #{modified_lstm_forward.1} parent=31 // pred_check_branch
          %203 = sbr.rel (%p201) target = $region36
        $region35: #{modified_lstm_forward.1} parent=31 // pred_region
          %p204 = scmp.lt.s32.totalorder %s13, 7
          %s205 = scalar_select %p204, %s13, 7
          %s206 = scalar_lea.vmem %s0, %s205
        $region36: #{modified_lstm_forward.1} parent=31 // pred_fallthru
          _
        // Predicated region
        $region37: #{modified_lstm_forward.1} parent=31 // pred_check
          %p207 = pneg %p122
        $region38: #{modified_lstm_forward.1} parent=31 // pred_check_branch
          %209 = sbr.rel (%p207) target = $region40
        $region39: #{modified_lstm_forward.1} parent=31 // pred_region
          %p210 = scmp.lt.s32.totalorder %s13, 7
          %s211 = scalar_select %p210, %s13, 7
          %s212 = smul.addr %s211, 4
          %s213 = smul.addr %s212, 8
          %s214 = scalar_lea.vmem %s4, %s213
        $region40: #{modified_lstm_forward.1} parent=31 // pred_fallthru
          _
      $region32: #{modified_lstm_forward.1} parent=5 // pred_fallthru
        _
      %p215 = scmp.le.s32.totalorder 1, %s13
      %p216 = scmp.lt.s32.totalorder %s13, 9
      %p217 = pnand %p215, %p216
      %p218 = pneg %p217
      // Predicated region
      $region41: #{modified_lstm_forward.1} parent=5 // pred_check
        _
      $region42: #{modified_lstm_forward.1} parent=5 // pred_check_branch
        %220 = sbr.rel (%p217) target = $region44
      $region43: #{modified_lstm_forward.1} parent=5 // pred_region
        %s221 = ssub.s32 %s13, 1
        %p222 = scmp.lt.s32.totalorder %s18, 7
        %s223 = scalar_select %p222, %s18, 7
        %s224 = scalar_lea.vmem %s0, %s223
        %p225 = pneg %p39
        %p226 = pneg %p36
        %p227 = pneg %p60
        %p228 = pneg %p57
        %p229 = pneg %p81
        %p230 = pneg %p78
        %p231 = pneg %p102
        %p232 = pneg %p99
        %p233 = scmp.lt.s32.totalorder %s18, 7
        %s234 = scalar_select %p233, %s18, 7
        %s235 = smul.addr %s234, 4
        %s236 = smul.addr %s235, 8
        %s237 = scalar_lea.vmem %s4, %s236
        %p238 = pneg %p128
        %p239 = pneg %p125
        %p240 = pneg %p149
        %p241 = pneg %p146
        %p242 = pneg %p170
        %p243 = pneg %p167
        %p244 = scmp.lt.s32.totalorder %s18, 7
        %s245 = scalar_select %p244, %s18, 7
        %s246 = scalar_lea.vmem %s0, %s245
        %p247 = scmp.lt.s32.totalorder %s18, 7
        %s248 = scalar_select %p247, %s18, 7
        %s249 = smul.addr %s248, 4
        %s250 = smul.addr %s249, 8
        %s251 = scalar_lea.vmem %s4, %s250
        %p252 = scmp.eq.s32.totalorder %s18, 0
        // Predicated region
        $region45: #{modified_lstm_forward.1} parent=43 // pred_check
          %p253 = pneg %p252
        $region46: #{modified_lstm_forward.1} parent=43 // pred_check_branch
          %255 = sbr.rel (%p253) target = $region48
        $region47: #{modified_lstm_forward.1} parent=43 // pred_region
          %vm256 = vcmask 253952
          %257 = vst.msk [vmem:[#allocation2] sm:$0x1] %vm256, 0.0
          %258 = vst.msk [vmem:[#allocation2 + $0x1] sm:$0x1] %vm256, 0.0
          %259 = vst.msk [vmem:[#allocation3] sm:$0x1] %vm256, 0.0
          %260 = vst.msk [vmem:[#allocation3 + $0x1] sm:$0x1] %vm256, 0.0
          %vm261 = vcmask 57344
          %262 = vst.msk [vmem:[#allocation4] sm:$0x1] %vm261, 0.0
        $region48: #{modified_lstm_forward.1} parent=43 // pred_fallthru
          _
        %v263 = vld [vmem:[%s246] sm:$0x1]
        %v264 = vld [vmem:[#allocation2] sm:$0x1]
        %v265 = vld [vmem:[#allocation3] sm:$0x1]
        %v266 = vld [vmem:[%s1] sm:$0xff]
        %v267 = vld [vmem:[%s1 + $0x8] sm:$0xff]
        %v268 = vld [vmem:[%s1 + $0x10] sm:$0xff]
        %v269 = vld [vmem:[%s1 + $0x18] sm:$0xff]
        %v270 = vld [vmem:[%s1 + $0x20] sm:$0xff]
        %v271 = vld [vmem:[%s1 + $0x28] sm:$0xff]
        %v273 = vlaneseq
        %v274 = vshrl.u32 %v273, 7
        %v275 = vsub.s32 0, %v274
        %v276 = vrot.slane %v264, %v275
        %277 = vrot.lane.b32.xlu0 %v276, 16
        %v278 = vpop.permute.xlu0 %277
        %vm280 = vcmask 130048
        %v281 = vsel %vm280, %v263, %v278
        %v282 = vld [vmem:[%s3] sm:$0x1]
        %vm283 = vcmask 392192
        %v285 = vsel %vm283, %v281, 0
        %287 = vmatprep.subr.mxu0 0.0
        %288 = vmatpush1.msra.mxu0 0.0
        %289 = vmatprep.subr.mxu0 0.0
        %290 = vmatpush1.msra.mxu0 0.0
        %291 = vmatprep.subr.mxu0 0.0
        %292 = vmatpush1.msra.mxu0 0.0
        %293 = vmatprep.subr.mxu0 0.0
        %294 = vmatpush1.msra.mxu0 0.0
        %295 = vmatprep.subr.mxu0 0.0
        %296 = vmatpush1.msra.mxu0 0.0
        %297 = vmatprep.subr.mxu0 0.0
        %298 = vmatpush1.msra.mxu0 0.0
        %299 = vmatprep.subr.mxu0 0.0
        %300 = vmatpush1.msra.mxu0 0.0
        %301 = vmatprep.subr.mxu0 0.0
        %302 = vmatpush1.msra.mxu0 0.0
        %303 = vmatprep.subr.mxu0 0.0
        %304 = vmatpush1.msra.mxu0 0.0
        %305 = vmatprep.subr.mxu0 0.0
        %306 = vmatpush1.msra.mxu0 0.0
        %307 = vmatprep.subr.mxu0 0.0
        %308 = vmatpush1.msra.mxu0 %v271
        %309 = vmatprep.subr.mxu0 0.0
        %310 = vmatpush1.msra.mxu0 %v270
        %311 = vmatprep.subr.mxu0 0.0
        %312 = vmatpush1.msra.mxu0 %v269
        %313 = vmatprep.subr.mxu0 0.0
        %314 = vmatpush1.msra.mxu0 %v268
        %315 = vmatprep.subr.mxu0 0.0
        %316 = vmatpush1.msra.mxu0 %v267
        %317 = vmatprep.subr.mxu0 0.0
        %318 = vmatpush1.msra.mxu0 %v266
        %319 = vmatprep.subr.mxu0 0.0
        %320 = vmatpush2.msra.mxu0 0.0
        %321 = vmatprep.subr.mxu0 0.0
        %322 = vmatpush2.msra.mxu0 0.0
        %323 = vmatprep.subr.mxu0 0.0
        %324 = vmatpush2.msra.mxu0 0.0
        %325 = vmatprep.subr.mxu0 0.0
        %326 = vmatpush2.msra.mxu0 0.0
        %327 = vmatprep.subr.mxu0 0.0
        %328 = vmatpush2.msra.mxu0 0.0
        %329 = vmatprep.subr.mxu0 0.0
        %330 = vmatpush2.msra.mxu0 0.0
        %331 = vmatprep.subr.mxu0 0.0
        %332 = vmatpush2.msra.mxu0 0.0
        %333 = vmatprep.subr.mxu0 0.0
        %334 = vmatpush2.msra.mxu0 0.0
        %335 = vmatprep.subr.mxu0 0.0
        %336 = vmatpush2.msra.mxu0 0.0
        %337 = vmatprep.subr.mxu0 0.0
        %338 = vmatpush2.msra.mxu0 0.0
        %339 = vmatprep.subr.mxu0 0.0
        %340 = vmatpush2.msra.mxu0 0.0
        %341 = vmatprep.subr.mxu0 0.0
        %342 = vmatpush2.msra.mxu0 0.0
        %343 = vmatprep.subr.mxu0 0.0
        %344 = vmatpush2.msra.mxu0 0.0
        %345 = vmatprep.subr.mxu0 0.0
        %346 = vmatpush2.msra.mxu0 0.0
        %347 = vmatprep.subr.mxu0 0.0
        %348 = vmatpush2.msra.mxu0 0.0
        %349 = vmatprep.subr.mxu0 0.0
        %350 = vmatpush2.msra.mxu0 0.0
        %351 = vmatprep.mubr.f32.mxu0 0.0
        %352 = vmatmul.mubr.f32.gmra.mxu0 %v285
        %v353 = vpop.f32.mrf.mxu0
        %v354 = vadd.f32 %v282, %v353
        %v355 = vpop.f32.mrf.mxu0
        %356 = vdwg.mxu0
        %v357 = vxor.u32 %v354, 2147483648
        %v358 = vmul.f32 %v357, 1.442695
        %v359 = vpow.pop %v358
        %v360 = vadd.f32 %v359, 1.0
        %v361 = vrcp.pop %v360
        %v362 = vmul.f32 1.0, %v361
        %v363 = vtanh.pop %v354
        %v365 = vlaneseq
        %v366 = vshrl.u32 %v365, 7
        %v367 = vsub.s32 0, %v366
        %v368 = vrot.slane %v265, %v367
        %369 = vrot.lane.b32.xlu0 %v368, 32
        %v370 = vpop.permute.xlu0 %369
        %v372 = vmul.f32 %v362, %v370
        %374 = vrot.lane.b32.xlu0 %v363, 64
        %v375 = vpop.permute.xlu0 %374
        %v377 = vmul.f32 %v362, %v375
        %379 = vrot.lane.b32.xlu0 %v377, 32
        %v380 = vpop.permute.xlu0 %379
        %v382 = vadd.f32 %v372, %v380
        %v383 = vtanh.pop %v382
        %385 = vrot.lane.b32.xlu0 %v383, 64
        %v386 = vpop.permute.xlu0 %385
        %v388 = vmul.f32 %v362, %v386
        %390 = vrot.lane.b32.xlu0 %v382, 96
        %v391 = vpop.permute.xlu0 %390
        %vm393 = vcmask 253952
        %394 = vst.msk [vmem:[#allocation3] sm:$0x1] %vm393, %v391
        %396 = vrot.lane.b32.xlu0 %v388, 32
        %v397 = vpop.permute.xlu0 %396
        %399 = vst.msk [vmem:[#allocation2] sm:$0x1] %vm393, %v397
        %s400 = scalar_lea.vmem [#allocation2], 1
        %v401 = vld [vmem:[%s400] sm:$0x1]
        %s402 = scalar_lea.vmem [#allocation3], 1
        %v403 = vld [vmem:[%s402] sm:$0x1]
        %v404 = vld [vmem:[%s2] sm:$0xff]
        %v405 = vld [vmem:[%s2 + $0x8] sm:$0xff]
        %v406 = vld [vmem:[%s2 + $0x10] sm:$0xff]
        %v407 = vld [vmem:[%s2 + $0x18] sm:$0xff]
        %v408 = vld [vmem:[%s2 + $0x20] sm:$0xff]
        %v409 = vld [vmem:[%s2 + $0x28] sm:$0xff]
        %v410 = vld [vmem:[%s2 + $0x30] sm:$0xff]
        %v411 = vld [vmem:[%s2 + $0x38] sm:$0xff]
        %v413 = vlaneseq
        %v414 = vshrl.u32 %v413, 7
        %v415 = vsub.s32 0, %v414
        %v416 = vrot.slane %v401, %v415
        %417 = vrot.lane.b32.xlu0 %v416, 32
        %v418 = vpop.permute.xlu0 %417
        %vm420 = vcmask 261120
        %v421 = vsel %vm420, %v397, %v418
        %s422 = scalar_lea.vmem %s3, 1
        %v423 = vld [vmem:[%s422] sm:$0x1]
        %vm424 = vcmask 523264
        %v426 = vsel %vm424, %v421, 0
        %428 = vmatprep.subr.mxu0 0.0
        %429 = vmatpush1.msra.mxu0 0.0
        %430 = vmatprep.subr.mxu0 0.0
        %431 = vmatpush1.msra.mxu0 0.0
        %432 = vmatprep.subr.mxu0 0.0
        %433 = vmatpush1.msra.mxu0 0.0
        %434 = vmatprep.subr.mxu0 0.0
        %435 = vmatpush1.msra.mxu0 0.0
        %436 = vmatprep.subr.mxu0 0.0
        %437 = vmatpush1.msra.mxu0 0.0
        %438 = vmatprep.subr.mxu0 0.0
        %439 = vmatpush1.msra.mxu0 0.0
        %440 = vmatprep.subr.mxu0 0.0
        %441 = vmatpush1.msra.mxu0 0.0
        %442 = vmatprep.subr.mxu0 0.0
        %443 = vmatpush1.msra.mxu0 0.0
        %444 = vmatprep.subr.mxu0 0.0
        %445 = vmatpush1.msra.mxu0 %v411
        %446 = vmatprep.subr.mxu0 0.0
        %447 = vmatpush1.msra.mxu0 %v410
        %448 = vmatprep.subr.mxu0 0.0
        %449 = vmatpush1.msra.mxu0 %v409
        %450 = vmatprep.subr.mxu0 0.0
        %451 = vmatpush1.msra.mxu0 %v408
        %452 = vmatprep.subr.mxu0 0.0
        %453 = vmatpush1.msra.mxu0 %v407
        %454 = vmatprep.subr.mxu0 0.0
        %455 = vmatpush1.msra.mxu0 %v406
        %456 = vmatprep.subr.mxu0 0.0
        %457 = vmatpush1.msra.mxu0 %v405
        %458 = vmatprep.subr.mxu0 0.0
        %459 = vmatpush1.msra.mxu0 %v404
        %460 = vmatprep.subr.mxu0 0.0
        %461 = vmatpush2.msra.mxu0 0.0
        %462 = vmatprep.subr.mxu0 0.0
        %463 = vmatpush2.msra.mxu0 0.0
        %464 = vmatprep.subr.mxu0 0.0
        %465 = vmatpush2.msra.mxu0 0.0
        %466 = vmatprep.subr.mxu0 0.0
        %467 = vmatpush2.msra.mxu0 0.0
        %468 = vmatprep.subr.mxu0 0.0
        %469 = vmatpush2.msra.mxu0 0.0
        %470 = vmatprep.subr.mxu0 0.0
        %471 = vmatpush2.msra.mxu0 0.0
        %472 = vmatprep.subr.mxu0 0.0
        %473 = vmatpush2.msra.mxu0 0.0
        %474 = vmatprep.subr.mxu0 0.0
        %475 = vmatpush2.msra.mxu0 0.0
        %476 = vmatprep.subr.mxu0 0.0
        %477 = vmatpush2.msra.mxu0 0.0
        %478 = vmatprep.subr.mxu0 0.0
        %479 = vmatpush2.msra.mxu0 0.0
        %480 = vmatprep.subr.mxu0 0.0
        %481 = vmatpush2.msra.mxu0 0.0
        %482 = vmatprep.subr.mxu0 0.0
        %483 = vmatpush2.msra.mxu0 0.0
        %484 = vmatprep.subr.mxu0 0.0
        %485 = vmatpush2.msra.mxu0 0.0
        %486 = vmatprep.subr.mxu0 0.0
        %487 = vmatpush2.msra.mxu0 0.0
        %488 = vmatprep.subr.mxu0 0.0
        %489 = vmatpush2.msra.mxu0 0.0
        %490 = vmatprep.subr.mxu0 0.0
        %491 = vmatpush2.msra.mxu0 0.0
        %492 = vmatprep.mubr.f32.mxu0 0.0
        %493 = vmatmul.mubr.f32.gmra.mxu0 %v426
        %v494 = vpop.f32.mrf.mxu0
        %v495 = vadd.f32 %v423, %v494
        %v496 = vpop.f32.mrf.mxu0
        %497 = vdwg.mxu0
        %v498 = vxor.u32 %v495, 2147483648
        %v499 = vmul.f32 %v498, 1.442695
        %v500 = vpow.pop %v499
        %v501 = vadd.f32 %v500, 1.0
        %v502 = vrcp.pop %v501
        %v503 = vmul.f32 1.0, %v502
        %v504 = vtanh.pop %v495
        %v506 = vlaneseq
        %v507 = vshrl.u32 %v506, 7
        %v508 = vsub.s32 0, %v507
        %v509 = vrot.slane %v403, %v508
        %510 = vrot.lane.b32.xlu0 %v509, 32
        %v511 = vpop.permute.xlu0 %510
        %v513 = vmul.f32 %v503, %v511
        %515 = vrot.lane.b32.xlu0 %v504, 64
        %v516 = vpop.permute.xlu0 %515
        %v518 = vmul.f32 %v503, %v516
        %520 = vrot.lane.b32.xlu0 %v518, 32
        %v521 = vpop.permute.xlu0 %520
        %v523 = vadd.f32 %v513, %v521
        %v524 = vtanh.pop %v523
        %526 = vrot.lane.b32.xlu0 %v524, 64
        %v527 = vpop.permute.xlu0 %526
        %v529 = vmul.f32 %v503, %v527
        %531 = vrot.lane.b32.xlu0 %v523, 96
        %v532 = vpop.permute.xlu0 %531
        %534 = vst.msk [vmem:[%s402] sm:$0x1] %vm393, %v532
        %536 = vrot.lane.b32.xlu0 %v529, 32
        %v537 = vpop.permute.xlu0 %536
        %539 = vst.msk [vmem:[%s400] sm:$0x1] %vm393, %v537
        %v540 = vld [vmem:[#allocation4] sm:$0x1]
        %v541 = vld [vmem:[%s251] sm:$0xff]
        %v542 = vld [vmem:[%s251 + $0x8] sm:$0xff]
        %v543 = vld [vmem:[%s251 + $0x10] sm:$0xff]
        %v544 = vld [vmem:[%s251 + $0x18] sm:$0xff]
        %v545 = vsel %vm420, %v537, 0
        %547 = vmatprep.subr.mxu0 0.0
        %548 = vmatpush1.msra.mxu0 0.0
        %549 = vmatprep.subr.mxu0 0.0
        %550 = vmatpush1.msra.mxu0 0.0
        %551 = vmatprep.subr.mxu0 0.0
        %552 = vmatpush1.msra.mxu0 0.0
        %553 = vmatprep.subr.mxu0 0.0
        %554 = vmatpush1.msra.mxu0 0.0
        %555 = vmatprep.subr.mxu0 0.0
        %556 = vmatpush1.msra.mxu0 0.0
        %557 = vmatprep.subr.mxu0 0.0
        %558 = vmatpush1.msra.mxu0 0.0
        %559 = vmatprep.subr.mxu0 0.0
        %560 = vmatpush1.msra.mxu0 0.0
        %561 = vmatprep.subr.mxu0 0.0
        %562 = vmatpush1.msra.mxu0 0.0
        %563 = vmatprep.subr.mxu0 0.0
        %564 = vmatpush1.msra.mxu0 0.0
        %565 = vmatprep.subr.mxu0 0.0
        %566 = vmatpush1.msra.mxu0 0.0
        %567 = vmatprep.subr.mxu0 0.0
        %568 = vmatpush1.msra.mxu0 0.0
        %569 = vmatprep.subr.mxu0 0.0
        %570 = vmatpush1.msra.mxu0 0.0
        %571 = vmatprep.subr.mxu0 0.0
        %572 = vmatpush1.msra.mxu0 %v544
        %573 = vmatprep.subr.mxu0 0.0
        %574 = vmatpush1.msra.mxu0 %v543
        %575 = vmatprep.subr.mxu0 0.0
        %576 = vmatpush1.msra.mxu0 %v542
        %577 = vmatprep.subr.mxu0 0.0
        %578 = vmatpush1.msra.mxu0 %v541
        %579 = vmatprep.subr.mxu0 0.0
        %580 = vmatpush2.msra.mxu0 0.0
        %581 = vmatprep.subr.mxu0 0.0
        %582 = vmatpush2.msra.mxu0 0.0
        %583 = vmatprep.subr.mxu0 0.0
        %584 = vmatpush2.msra.mxu0 0.0
        %585 = vmatprep.subr.mxu0 0.0
        %586 = vmatpush2.msra.mxu0 0.0
        %587 = vmatprep.subr.mxu0 0.0
        %588 = vmatpush2.msra.mxu0 0.0
        %589 = vmatprep.subr.mxu0 0.0
        %590 = vmatpush2.msra.mxu0 0.0
        %591 = vmatprep.subr.mxu0 0.0
        %592 = vmatpush2.msra.mxu0 0.0
        %593 = vmatprep.subr.mxu0 0.0
        %594 = vmatpush2.msra.mxu0 0.0
        %595 = vmatprep.subr.mxu0 0.0
        %596 = vmatpush2.msra.mxu0 0.0
        %597 = vmatprep.subr.mxu0 0.0
        %598 = vmatpush2.msra.mxu0 0.0
        %599 = vmatprep.subr.mxu0 0.0
        %600 = vmatpush2.msra.mxu0 0.0
        %601 = vmatprep.subr.mxu0 0.0
        %602 = vmatpush2.msra.mxu0 0.0
        %603 = vmatprep.subr.mxu0 0.0
        %604 = vmatpush2.msra.mxu0 0.0
        %605 = vmatprep.subr.mxu0 0.0
        %606 = vmatpush2.msra.mxu0 0.0
        %607 = vmatprep.subr.mxu0 0.0
        %608 = vmatpush2.msra.mxu0 0.0
        %609 = vmatprep.subr.mxu0 0.0
        %610 = vmatpush2.msra.mxu0 0.0
        %611 = vmatprep.mubr.f32.mxu0 0.0
        %612 = vmatmul.mubr.f32.gmra.mxu0 %v545
        %v613 = vpop.f32.mrf.mxu0
        %v614 = vadd.f32 0.0, %v613
        %v615 = vpop.f32.mrf.mxu0
        %616 = vdwg.mxu0
        %v617 = vadd.f32 %v540, %v614
        %vm618 = vcmask 57344
        %619 = vst.msk [vmem:[#allocation4] sm:$0x1] %vm618, %v617
        %p620 = scmp.eq.s32.totalorder %s18, 7
        // Predicated region
        $region49: #{modified_lstm_forward.1} parent=43 // pred_check
          %p621 = pneg %p620
        $region50: #{modified_lstm_forward.1} parent=43 // pred_check_branch
          %623 = sbr.rel (%p621) target = $region52
        $region51: #{modified_lstm_forward.1} parent=43 // pred_region
          %v624 = vld [vmem:[#allocation4] sm:$0x1]
          %v625 = vld [vmem:[%s5] sm:$0x1]
          %v626 = vadd.f32 %v624, %v625
          %v627 = vxor.u32 %v626, 2147483648
          %v628 = vmul.f32 %v627, 1.442695
          %v629 = vpow.pop %v628
          %v630 = vadd.f32 %v629, 1.0
          %v631 = vrcp.pop %v630
          %v632 = vmul.f32 1.0, %v631
          %633 = vst.msk [vmem:[#allocation5] sm:$0x1] %vm618, %v632
        $region52: #{modified_lstm_forward.1} parent=43 // pred_fallthru
          _
        // Predicated region
        $region53: #{modified_lstm_forward.1} parent=43 // pred_check
          %p634 = pneg %p167
        $region54: #{modified_lstm_forward.1} parent=43 // pred_check_branch
          %636 = sbr.rel (%p634) target = $region56
        $region55: #{modified_lstm_forward.1} parent=43 // pred_region
          %s638 = ssub.s32 16, 16
          %639 = vsyncadd [#allocation6], %s638
          %s641 = sshll.u32 [#allocation5], 4
          %s642 = int_to_ptr.vmem [resolvable:$true] %s641
          %644 = dma.vmem_to_hbm [thread:$0]  %s642, 16, %s6, [#allocation6]
        $region56: #{modified_lstm_forward.1} parent=43 // pred_fallthru
          _
        // Predicated region
        $region57: #{modified_lstm_forward.1} parent=43 // pred_check
          %p645 = pneg %p167
        $region58: #{modified_lstm_forward.1} parent=43 // pred_check_branch
          %647 = sbr.rel (%p645) target = $region60
        $region59: #{modified_lstm_forward.1} parent=43 // pred_region
          %648 = dma.done [#allocation6], 16
        $region60: #{modified_lstm_forward.1} parent=43 // pred_fallthru
          _
      $region44: #{modified_lstm_forward.1} parent=5 // pred_fallthru
        _
      %p649 = scmp.le.s32.totalorder 2, %s13
      // Predicated region
      $region61: #{modified_lstm_forward.1} parent=5 // pred_check
        %p650 = pneg %p649
      $region62: #{modified_lstm_forward.1} parent=5 // pred_check_branch
        %652 = sbr.rel (%p650) target = $region64
      $region63: #{modified_lstm_forward.1} parent=5 // pred_region
        %s653 = ssub.s32 %s13, 2
      $region64: #{modified_lstm_forward.1} parent=5 // pred_fallthru
        _
    $region6: #{modified_lstm_forward.1} parent=1 // loop_footer
      %s17 = sadd.s32 1, %s13
    $region7: #{modified_lstm_forward.1} parent=1 // loop_footer_branch
      %12 = sbr.rel target = $region3
    $region8: #{modified_lstm_forward.1} parent=1 // loop_exit
      _
    %654 = vsyncpa [#allocation6], 1
    %s655 = scalar_lea.sflag [#allocation6], 1
    %656 = vsyncpa %s655, 1

</llo_original>
